<compile_context>
chip_gen: v7x
topology: tpu7x:2x2x1
jax: 0.10.0
libtpu: 0.0.40
codegen_flags: <defaults>
</compile_context>

<pallas_src>
import functools

import jax
import jax.numpy as jnp
from jax.experimental import pallas as pl
from jax.experimental.pallas import tpu as pltpu

SUBLANE = 8
LANE = 128


def _round_up(x, m):
    return (x + m - 1) // m * m


# -----------------------------------------------------------------------------------------------
# Kernel 1 (init-time, runs exactly once): weight-only embedding table.
#     table = relu(relu(W1 + b1) @ W2 + b2)          (rows, C_out),  rows = V (jpt) or T (tpt)
# Grid-less single invocation: whole (pre-padded, (8,128)-aligned) operands resident in VMEM,
# no per-step overhead, no double-buffering.
# -----------------------------------------------------------------------------------------------
def _table_kernel(w1_ref, b1_ref, w2_ref, b2_ref, o_ref):
    h = jnp.maximum(w1_ref[...] + b1_ref[...], 0.0)                          # ReLU after conv1
    y = jnp.dot(h, w2_ref[...], preferred_element_type=jnp.float32) + b2_ref[...]
    o_ref[...] = jnp.maximum(y, 0.0)                                         # ReLU after conv2


def idx_embed_table(w1p, b1p, w2p, b2p):
    rows_p = w1p.shape[0]
    cout_p = w2p.shape[1]
    vmem = pltpu.MemorySpace.VMEM
    return pl.pallas_call(
        _table_kernel,
        out_shape=jax.ShapeDtypeStruct((rows_p, cout_p), jnp.float32),
        in_specs=[pl.BlockSpec(memory_space=vmem)] * 4,    # whole arrays in VMEM, no pipelining
        out_specs=pl.BlockSpec(memory_space=vmem),
    )(w1p, b1p, w2p, b2p)


# -----------------------------------------------------------------------------------------------
# Kernel 2 (per forward call): broadcast the cached lane-dense slab (C_out, V*T) to every batch
# element.  grid=(bs,) "parallel" (uses both TensorCores on v7x); the slab's block index is
# constant so it is DMA'd into VMEM once; the only real work is the near-lane-dense output store.
# -----------------------------------------------------------------------------------------------
def _bcast_kernel(slab_ref, o_ref):
    o_ref[0] = slab_ref[...]


def idx_broadcast(slab, bs):
    c, l = slab.shape
    return pl.pallas_call(
        _bcast_kernel,
        out_shape=jax.ShapeDtypeStruct((bs, c, l), jnp.float32),
        grid=(bs,),
        in_specs=[pl.BlockSpec((c, l), lambda n: (0, 0))],       # full (C_out, V*T) block
        out_specs=pl.BlockSpec((1, c, l), lambda n: (n, 0, 0)),  # lane-dense per-batch slab
        compiler_params=pltpu.CompilerParams(dimension_semantics=("parallel",)),
    )(slab)


@functools.partial(jax.jit, static_argnums=(1, 2, 3, 4))
def _idx_forward(slab, bs, V, T, C):
    flat = idx_broadcast(slab, bs)                               # (bs, C_out, V*T) lane-dense
    # Reshape back to the module's NCHW contract.  Jitted so a fused consumer never has to
    # materialize the lane-sparse (V=25, T=20) layout as a separate HBM array.
    return flat.reshape(bs, C, V, T)


class IdxBlockPallas:
    """JAX/Pallas re-implementation of IdxBlock (deterministic synthetic init)."""

    def __init__(self, T=20, V=25, out_channels=64, mode="jpt", key=jax.random.PRNGKey(0)):
        self.mode = mode
        self.T = T
        self.V = V
        self.out_channels = out_channels
        in_ch = V if mode == "jpt" else T
        self.in_ch = in_ch
        hidden = 64

        k1w, k1b, k2w, k2b = jax.random.split(key, 4)
        bound1 = 1.0 / float(in_ch) ** 0.5
        bound2 = 1.0 / float(hidden) ** 0.5
        # Conv2d(in_ch, 64, 1): weight (64, in_ch, 1, 1) stored transposed as (in_ch, 64)
        self.w1 = jax.random.uniform(k1w, (in_ch, hidden), jnp.float32, -bound1, bound1)
        self.b1 = jax.random.uniform(k1b, (1, hidden), jnp.float32, -bound1, bound1)
        # Conv2d(64, out_channels, 1): weight (out, 64, 1, 1) stored transposed as (64, out)
        self.w2 = jax.random.uniform(k2w, (hidden, out_channels), jnp.float32, -bound2, bound2)
        self.b2 = jax.random.uniform(k2b, (1, out_channels), jnp.float32, -bound2, bound2)

        # ---- one-time cached table (weights are static: never recomputed per forward) ----
        # Zero padding is exact: padded hidden columns give relu(0+0)=0 into zero rows of w2p;
        # padded output columns stay 0.
        rows_p = _round_up(in_ch, SUBLANE)          # 25 -> 32 (jpt) / 20 -> 24 (tpt)
        hid_p = _round_up(hidden, LANE)             # 64 -> 128
        cout_p = _round_up(out_channels, LANE)      # 64 -> 128
        w1p = jnp.pad(self.w1, ((0, rows_p - in_ch), (0, hid_p - hidden)))
        b1p = jnp.pad(self.b1, ((0, 0), (0, hid_p - hidden)))
        w2p = jnp.pad(self.w2, ((0, hid_p - hidden), (0, cout_p - out_channels)))
        b2p = jnp.pad(self.b2, ((0, 0), (0, cout_p - out_channels)))
        table_p = idx_embed_table(w1p, b1p, w2p, b2p)            # (rows_p, cout_p), Pallas

        # Padded table rows carry relu(relu(b1)@w2+b2) != 0, so slice BEFORE expansion.
        table = table_p[:in_ch, :out_channels]                   # (in_ch, C_out)
        tct = table.T                                            # (C_out, in_ch)
        if mode == "jpt":
            # out[n, c, v, t] = table[v, c]  ->  slab[c, v*T + t] = tct[c, v]
            slab = jnp.repeat(tct, T, axis=1)                    # (C_out, V*T)
        else:
            # out[n, c, v, t] = table[t, c]  ->  slab[c, v*T + t] = tct[c, t]
            slab = jnp.tile(tct, (1, V))                         # (C_out, V*T)
        self._slab = jax.block_until_ready(slab)                 # cached lane-dense slab

    def __call__(self, x):
        bs = int(x.shape[0])   # like the original module, only the batch size of x is used
        return _idx_forward(self._slab, bs, self.V, self.T, self.out_channels)

    def reference(self, x):
        """Pure-JAX reference of the literal forward (one-hot conv path) for verification."""
        bs = x.shape[0]
        if self.mode == "jpt":
            idx = jnp.broadcast_to(
                jnp.eye(self.V, dtype=jnp.float32)[None, :, :, None],
                (bs, self.V, self.V, self.T))
        else:
            idx = jnp.broadcast_to(
                jnp.eye(self.T, dtype=jnp.float32)[None, :, None, :],
                (bs, self.T, self.V, self.T))
        n, c, h, w = idx.shape
        xr = idx.transpose(0, 2, 3, 1).reshape(n * h * w, c)
        hdn = jnp.maximum(xr @ self.w1 + self.b1, 0.0)
        y = jnp.maximum(hdn @ self.w2 + self.b2, 0.0)
        return y.reshape(n, h, w, self.out_channels).transpose(0, 3, 1, 2)


if __name__ == "__main__":
    key = jax.random.PRNGKey(0)
    k_in, k_jpt, k_tpt = jax.random.split(key, 3)

    T, V, C_out, bs = 20, 25, 64, 2
    # Input is only used for its batch size (and device) in the original module.
    x = jax.random.normal(k_in, (bs, 3, V, T), dtype=jnp.float32)

    for mode, k in (("jpt", k_jpt), ("tpt", k_tpt)):
        block = IdxBlockPallas(T=T, V=V, out_channels=C_out, mode=mode, key=k)
        out = jax.block_until_ready(block(x))
        ref = block.reference(x)
        assert out.shape == (bs, C_out, V, T), out.shape
        assert jnp.allclose(out, ref, atol=1e-5, rtol=1e-5), f"mismatch vs reference ({mode})"

    print("KERNEL_OK")
</pallas_src>

<mosaic_0001>
module attributes {stable_mosaic.version = 11 : i64} {
  func.func @_table_kernel(%arg0: memref<32x128xf32, #tpu.memory_space<vmem>>, %arg1: memref<1x128xf32, #tpu.memory_space<vmem>>, %arg2: memref<128x128xf32, #tpu.memory_space<vmem>>, %arg3: memref<1x128xf32, #tpu.memory_space<vmem>>, %arg4: memref<32x128xf32, #tpu.memory_space<vmem>>) attributes {dimension_semantics = [], scalar_prefetch = 0 : i64, scratch_operands = 0 : i64, tpu.core_type = #tpu.core_type<tc>} {
    %c0 = arith.constant 0 : index
    %c0_0 = arith.constant 0 : index
    %0 = vector.load %arg0[%c0, %c0_0] : memref<32x128xf32, #tpu.memory_space<vmem>>, vector<32x128xf32>
    %c0_1 = arith.constant 0 : index
    %c0_2 = arith.constant 0 : index
    %1 = vector.load %arg1[%c0_1, %c0_2] : memref<1x128xf32, #tpu.memory_space<vmem>>, vector<1x128xf32>
    %2 = vector.broadcast %1 : vector<1x128xf32> to vector<32x128xf32>
    %3 = arith.addf %0, %2 : vector<32x128xf32>
    %cst = arith.constant 0.000000e+00 : f32
    %4 = vector.broadcast %cst : f32 to vector<32x128xf32>
    %5 = arith.maximumf %3, %4 : vector<32x128xf32>
    %c0_3 = arith.constant 0 : index
    %c0_4 = arith.constant 0 : index
    %6 = vector.load %arg2[%c0_3, %c0_4] : memref<128x128xf32, #tpu.memory_space<vmem>>, vector<128x128xf32>
    %cst_5 = arith.constant dense<0.000000e+00> : vector<32x128xf32>
    %7 = tpu.matmul %5, %6, %cst_5 {dimension_numbers = #tpu.dot_dimension_numbers<[1], [0], [0], [1], [0, 0, 1, 1], [], []>} : vector<32x128xf32>, vector<128x128xf32>, vector<32x128xf32> -> vector<32x128xf32>
    %c0_6 = arith.constant 0 : index
    %c0_7 = arith.constant 0 : index
    %8 = vector.load %arg3[%c0_6, %c0_7] : memref<1x128xf32, #tpu.memory_space<vmem>>, vector<1x128xf32>
    %9 = vector.broadcast %8 : vector<1x128xf32> to vector<32x128xf32>
    %10 = arith.addf %7, %9 : vector<32x128xf32>
    %cst_8 = arith.constant 0.000000e+00 : f32
    %11 = vector.broadcast %cst_8 : f32 to vector<32x128xf32>
    %12 = arith.maximumf %10, %11 : vector<32x128xf32>
    %c0_9 = arith.constant 0 : index
    %c0_10 = arith.constant 0 : index
    %13 = vector.load %arg4[%c0_9, %c0_10] : memref<32x128xf32, #tpu.memory_space<vmem>>, vector<32x128xf32>
    tpu.vector_store %arg4[%c0_9, %c0_10], %12 {strides = array<i32>} : memref<32x128xf32, #tpu.memory_space<vmem>>, vector<32x128xf32>,
    return
  }
}

</mosaic_0001>

<llo_original>
// kernel: tpu_custom_call.1
$region0: #{tpu_custom_call.1}
  #allocation0 [shape = 'u32[]', space=smem, size = 0x4, offset = 0x4, fixed_abs, tag = 'smem constant byte address 0x4 - core index']
  #allocation1 [shape = 'u32[144,128]{1,0:T(1,128)}', space=vmem, size = 0x12000, scoped, tag = 'internal scratch']
  %s0 = inlined_call_operand.hbm [shape: f32[32,128], index: 0, kind: input, shape index: {}]
  %s1 = inlined_call_operand.vmem [shape: f32[1,128], index: 1, kind: input, shape index: {}]
  %s2 = inlined_call_operand.hbm [shape: f32[128,128], index: 2, kind: input, shape index: {}]
  %s3 = inlined_call_operand.vmem [shape: f32[1,128], index: 3, kind: input, shape index: {}]
  %s4 = inlined_call_operand.hbm [shape: f32[32,128], index: 4, kind: output, shape index: {}]
  %s5 = sld [smem:[#allocation0]]
  $region34: #{tpu_custom_call.1} parent=0
    _
  %s7 = ssub.s32 1, %s5
  %s8 = scalar_select 0, %s7, %s5
  $region1: #{tpu_custom_call.1} parent=0
    #allocation2 [shape = 'u8[16384]{0}', space=vmem, size = 0x4000, scoped, tag = 'input window, operand 0, single buffered']
    #allocation3 [shape = 's32[1]{0}', space=sflag, size = 0x4, scoped, tag = 'scoped memory for tpu_custom_call.1']
    #allocation4 [shape = 's32[1]{0}', space=sflag, size = 0x4, scoped, tag = 'scoped memory for tpu_custom_call.1']
    #allocation5 [shape = 'u8[65536]{0}', space=vmem, size = 0x10000, scoped, tag = 'input window, operand 2, single buffered']
    #allocation6 [shape = 's32[1]{0}', space=sflag, size = 0x4, scoped, tag = 'scoped memory for tpu_custom_call.1']
    #allocation7 [shape = 'u8[16384]{0}', space=vmem, size = 0x4000, scoped, tag = 'output window, operand 0, single buffered']
    %9 = vsyncpa [#allocation3], 0
    %10 = vsyncpa [#allocation6], 0
    %11 = vsyncpa [#allocation4], 0
    // Predicated region
    $region2: #{tpu_custom_call.1} parent=1 // pred_check
      _
    $region3: #{tpu_custom_call.1} parent=1 // pred_check_branch
      %13 = sbr.rel (0) target = $region5
    $region4: #{tpu_custom_call.1} parent=1 // pred_region
      %s15 = ssub.s32 512, 512
      %16 = vsyncadd [#allocation3], %s15
      %s17 = sshll.u32 [#allocation2], 4
      %s18 = int_to_ptr.vmem [resolvable:$true] %s17
      %23 = dma.hbm_to_vmem [thread:$0]  %s0, 512, %s18, [#allocation3], 128, 128, 8
    $region5: #{tpu_custom_call.1} parent=1 // pred_fallthru
      _
    // Predicated region
    $region6: #{tpu_custom_call.1} parent=1 // pred_check
      _
    $region7: #{tpu_custom_call.1} parent=1 // pred_check_branch
      %25 = sbr.rel (0) target = $region9
    $region8: #{tpu_custom_call.1} parent=1 // pred_region
      _
    $region9: #{tpu_custom_call.1} parent=1 // pred_fallthru
      _
    // Predicated region
    $region10: #{tpu_custom_call.1} parent=1 // pred_check
      _
    $region11: #{tpu_custom_call.1} parent=1 // pred_check_branch
      %27 = sbr.rel (0) target = $region13
    $region12: #{tpu_custom_call.1} parent=1 // pred_region
      %s29 = ssub.s32 2048, 2048
      %30 = vsyncadd [#allocation6], %s29
      %s31 = sshll.u32 [#allocation5], 4
      %s32 = int_to_ptr.vmem [resolvable:$true] %s31
      %37 = dma.hbm_to_vmem [thread:$0]  %s2, 2048, %s32, [#allocation6], 128, 128, 8
    $region13: #{tpu_custom_call.1} parent=1 // pred_fallthru
      _
    // Predicated region
    $region14: #{tpu_custom_call.1} parent=1 // pred_check
      _
    $region15: #{tpu_custom_call.1} parent=1 // pred_check_branch
      %39 = sbr.rel (0) target = $region17
    $region16: #{tpu_custom_call.1} parent=1 // pred_region
      _
    $region17: #{tpu_custom_call.1} parent=1 // pred_fallthru
      _
    // Predicated region
    $region18: #{tpu_custom_call.1} parent=1 // pred_check
      _
    $region19: #{tpu_custom_call.1} parent=1 // pred_check_branch
      %41 = sbr.rel (0) target = $region21
    $region20: #{tpu_custom_call.1} parent=1 // pred_region
      %42 = dma.done [#allocation3], 512
    $region21: #{tpu_custom_call.1} parent=1 // pred_fallthru
      _
    // Predicated region
    $region22: #{tpu_custom_call.1} parent=1 // pred_check
      _
    $region23: #{tpu_custom_call.1} parent=1 // pred_check_branch
      %44 = sbr.rel (0) target = $region25
    $region24: #{tpu_custom_call.1} parent=1 // pred_region
      %45 = dma.done [#allocation6], 2048
    $region25: #{tpu_custom_call.1} parent=1 // pred_fallthru
      _
    %v46 = vld [vmem:[#allocation2] sm:$0xff]
    %v47 = vld [vmem:[#allocation2 + $0x8] sm:$0xff]
    %v48 = vld [vmem:[#allocation2 + $0x10] sm:$0xff]
    %v49 = vld [vmem:[#allocation2 + $0x18] sm:$0xff]
    %v50 = vld [vmem:[%s1] sm:$0x1]
    %v52 = vlaneseq
    %v53 = vshrl.u32 %v52, 7
    %v54 = vsub.s32 0, %v53
    %v55 = vrot.slane %v50, %v54
    %v57 = vadd.f32 %v46, %v55
    %v58 = vadd.f32 %v47, %v55
    %v59 = vadd.f32 %v48, %v55
    %v60 = vadd.f32 %v49, %v55
    %v61 = vmax.f32 %v57, 0.0
    %v62 = vmax.f32 %v58, 0.0
    %v63 = vmax.f32 %v59, 0.0
    %v64 = vmax.f32 %v60, 0.0
    %v65 = vld [vmem:[#allocation5] sm:$0xff]
    %v66 = vld [vmem:[#allocation5 + $0x8] sm:$0xff]
    %v67 = vld [vmem:[#allocation5 + $0x10] sm:$0xff]
    %v68 = vld [vmem:[#allocation5 + $0x18] sm:$0xff]
    %v69 = vld [vmem:[#allocation5 + $0x20] sm:$0xff]
    %v70 = vld [vmem:[#allocation5 + $0x28] sm:$0xff]
    %v71 = vld [vmem:[#allocation5 + $0x30] sm:$0xff]
    %v72 = vld [vmem:[#allocation5 + $0x38] sm:$0xff]
    %v73 = vld [vmem:[#allocation5 + $0x40] sm:$0xff]
    %v74 = vld [vmem:[#allocation5 + $0x48] sm:$0xff]
    %v75 = vld [vmem:[#allocation5 + $0x50] sm:$0xff]
    %v76 = vld [vmem:[#allocation5 + $0x58] sm:$0xff]
    %v77 = vld [vmem:[#allocation5 + $0x60] sm:$0xff]
    %v78 = vld [vmem:[#allocation5 + $0x68] sm:$0xff]
    %v79 = vld [vmem:[#allocation5 + $0x70] sm:$0xff]
    %v80 = vld [vmem:[#allocation5 + $0x78] sm:$0xff]
    %v81 = vld [vmem:[%s3] sm:$0x1]
    %v83 = vlaneseq
    %v84 = vshrl.u32 %v83, 7
    %v85 = vsub.s32 0, %v84
    %v86 = vrot.slane %v81, %v85
    %88 = vmatprep.subr.mxu0 0.0
    %89 = vmatpush1.msra.mxu0 %v65
    %90 = vmatprep.subr.mxu0 0.0
    %91 = vmatpush1.msra.mxu0 %v66
    %92 = vmatprep.subr.mxu0 0.0
    %93 = vmatpush1.msra.mxu0 %v67
    %94 = vmatprep.subr.mxu0 0.0
    %95 = vmatpush1.msra.mxu0 %v68
    %96 = vmatprep.subr.mxu0 0.0
    %97 = vmatpush1.msra.mxu0 %v69
    %98 = vmatprep.subr.mxu0 0.0
    %99 = vmatpush1.msra.mxu0 %v70
    %100 = vmatprep.subr.mxu0 0.0
    %101 = vmatpush1.msra.mxu0 %v71
    %102 = vmatprep.subr.mxu0 0.0
    %103 = vmatpush1.msra.mxu0 %v72
    %104 = vmatprep.subr.mxu0 0.0
    %105 = vmatpush1.msra.mxu0 %v73
    %106 = vmatprep.subr.mxu0 0.0
    %107 = vmatpush1.msra.mxu0 %v74
    %108 = vmatprep.subr.mxu0 0.0
    %109 = vmatpush1.msra.mxu0 %v75
    %110 = vmatprep.subr.mxu0 0.0
    %111 = vmatpush1.msra.mxu0 %v76
    %112 = vmatprep.subr.mxu0 0.0
    %113 = vmatpush1.msra.mxu0 %v77
    %114 = vmatprep.subr.mxu0 0.0
    %115 = vmatpush1.msra.mxu0 %v78
    %116 = vmatprep.subr.mxu0 0.0
    %117 = vmatpush1.msra.mxu0 %v79
    %118 = vmatprep.subr.mxu0 0.0
    %119 = vmatpush1.msra.mxu0 %v80
    %120 = vmatprep.subr.mxu0 0.0
    %121 = vmatpush1.msra.mxu0 0.0
    %122 = vmatprep.subr.mxu0 0.0
    %123 = vmatpush1.msra.mxu0 0.0
    %124 = vmatprep.subr.mxu0 0.0
    %125 = vmatpush1.msra.mxu0 0.0
    %126 = vmatprep.subr.mxu0 0.0
    %127 = vmatpush1.msra.mxu0 0.0
    %128 = vmatprep.subr.mxu0 0.0
    %129 = vmatpush1.msra.mxu0 0.0
    %130 = vmatprep.subr.mxu0 0.0
    %131 = vmatpush1.msra.mxu0 0.0
    %132 = vmatprep.subr.mxu0 0.0
    %133 = vmatpush1.msra.mxu0 0.0
    %134 = vmatprep.subr.mxu0 0.0
    %135 = vmatpush1.msra.mxu0 0.0
    %136 = vmatprep.subr.mxu0 0.0
    %137 = vmatpush1.msra.mxu0 0.0
    %138 = vmatprep.subr.mxu0 0.0
    %139 = vmatpush1.msra.mxu0 0.0
    %140 = vmatprep.subr.mxu0 0.0
    %141 = vmatpush1.msra.mxu0 0.0
    %142 = vmatprep.subr.mxu0 0.0
    %143 = vmatpush1.msra.mxu0 0.0
    %144 = vmatprep.subr.mxu0 0.0
    %145 = vmatpush1.msra.mxu0 0.0
    %146 = vmatprep.subr.mxu0 0.0
    %147 = vmatpush1.msra.mxu0 0.0
    %148 = vmatprep.subr.mxu0 0.0
    %149 = vmatpush1.msra.mxu0 0.0
    %150 = vmatprep.subr.mxu0 0.0
    %151 = vmatpush1.msra.mxu0 0.0
    %152 = vmatprep.mubr.f32.mxu0 0.0
    %153 = vmatmul.mubr.f32.gmra.mrb[0].mxu0 %v61
    %v154 = vpop.f32.mrb[0].mxu0
    %v155 = vadd.f32 %v86, %v154
    %v156 = vpop.f32.mrb[0].mxu0
    %157 = vmatprep.mubr.f32.mxu0 0.0
    %158 = vmatmul.mubr.f32.gmra.mrb[0].mxu0 %v62
    %v159 = vpop.f32.mrb[0].mxu0
    %v160 = vadd.f32 %v86, %v159
    %v161 = vpop.f32.mrb[0].mxu0
    %162 = vmatprep.mubr.f32.mxu0 0.0
    %163 = vmatmul.mubr.f32.gmra.mrb[0].mxu0 %v63
    %v164 = vpop.f32.mrb[0].mxu0
    %v165 = vadd.f32 %v86, %v164
    %v166 = vpop.f32.mrb[0].mxu0
    %167 = vmatprep.mubr.f32.mxu0 0.0
    %168 = vmatmul.mubr.f32.gmra.mrb[0].mxu0 %v64
    %v169 = vpop.f32.mrb[0].mxu0
    %v170 = vadd.f32 %v86, %v169
    %v171 = vpop.f32.mrb[0].mxu0
    %172 = vdwg.mxu0
    %v173 = vmax.f32 %v155, 0.0
    %v174 = vmax.f32 %v160, 0.0
    %v175 = vmax.f32 %v165, 0.0
    %v176 = vmax.f32 %v170, 0.0
    %177 = vst [vmem:[#allocation7] sm:$0xff] %v173
    %178 = vst [vmem:[#allocation7 + $0x8] sm:$0xff] %v174
    %179 = vst [vmem:[#allocation7 + $0x10] sm:$0xff] %v175
    %180 = vst [vmem:[#allocation7 + $0x18] sm:$0xff] %v176
    // Predicated region
    $region26: #{tpu_custom_call.1} parent=1 // pred_check
      _
    $region27: #{tpu_custom_call.1} parent=1 // pred_check_branch
      %182 = sbr.rel (0) target = $region29
    $region28: #{tpu_custom_call.1} parent=1 // pred_region
      %s184 = ssub.s32 512, 512
      %185 = vsyncadd [#allocation4], %s184
      %s186 = sshll.u32 [#allocation7], 4
      %s187 = int_to_ptr.vmem [resolvable:$true] %s186
      %192 = dma.vmem_to_hbm [thread:$0]  %s187, 512, %s4, [#allocation4], 128, 128, 8
    $region29: #{tpu_custom_call.1} parent=1 // pred_fallthru
      _
    // Predicated region
    $region30: #{tpu_custom_call.1} parent=1 // pred_check
      _
    $region31: #{tpu_custom_call.1} parent=1 // pred_check_branch
      %194 = sbr.rel (0) target = $region33
    $region32: #{tpu_custom_call.1} parent=1 // pred_region
      %195 = dma.done [#allocation4], 512
    $region33: #{tpu_custom_call.1} parent=1 // pred_fallthru
      _
    %196 = vsyncpa [#allocation3], 1
    %197 = vsyncpa [#allocation6], 1
    %198 = vsyncpa [#allocation4], 1

</llo_original>
